<compile_context>
chip_gen: v7x
topology: tpu7x:2x2x1
jax: 0.10.0
libtpu: 0.0.40
codegen_flags: <defaults>
</compile_context>

<pallas_src>
import math
from functools import partial

import jax
import jax.numpy as jnp
from jax.experimental import pallas as pl
from jax.experimental.pallas import tpu as pltpu


_SQRT_2_OVER_PI = math.sqrt(2.0 / math.pi)


def _new_gelu(x):
    return 0.5 * x * (1.0 + jnp.tanh(_SQRT_2_OVER_PI * (x + 0.044715 * (x * x * x))))


def _mlp_kernel(x_ref, w1_ref, b1_ref, w2_ref, b2_ref, o_ref, acc_ref, *,
                dropout_p, seed):
    """Grid = (row tiles [parallel], hidden tiles [reduction])."""
    j = pl.program_id(1)

    @pl.when(j == 0)
    def _():
        # Fold the c_proj bias into the accumulator init (saves an epilogue add).
        acc_ref[...] = jnp.broadcast_to(b2_ref[...].astype(jnp.float32),
                                        acc_ref.shape)

    # c_fc slice for this hidden tile + bias + tanh-GELU, all in VMEM / f32.
    h = jnp.dot(x_ref[...], w1_ref[...], preferred_element_type=jnp.float32)
    h = _new_gelu(h + b1_ref[...].astype(jnp.float32))
    # Partial c_proj contribution of this hidden tile (f32 accumulation).
    acc_ref[...] += jnp.dot(h.astype(w2_ref.dtype), w2_ref[...],
                            preferred_element_type=jnp.float32)

    @pl.when(j == pl.num_programs(1) - 1)
    def _():
        out = acc_ref[...]
        if dropout_p > 0.0:
            # Inverted dropout via the hardware PRNG, seeded per row tile.
            # TODO(synk): RNG stream differs from torch.nn.Dropout's.
            pltpu.prng_seed(seed, pl.program_id(0))
            bits = pltpu.prng_random_bits(out.shape).astype(jnp.uint32)
            thresh = jnp.uint32(min(int(dropout_p * 4294967296.0), 4294967295))
            out = jnp.where(bits >= thresh, out * (1.0 / (1.0 - dropout_p)), 0.0)
        o_ref[...] = out.astype(o_ref.dtype)


def _round_up(x, m):
    return ((x + m - 1) // m) * m


def _cdiv(a, b):
    return (a + b - 1) // b


def _vmem_capacity_bytes():
    """Physical VMEM of the current chip; conservative fallback = 64 MiB (v7x)."""
    try:
        info = pltpu.get_tpu_info()
        cap = int(getattr(info, "vmem_capacity_bytes", 0) or 0)
        if cap > 0:
            return cap
    except Exception:
        pass
    return 64 * 1024 * 1024


def _choose_tiles(M, C, H, itemsize, budget):
    """Pick (tile_m, tile_h) so the double-buffered working set fits `budget`."""
    sub = 8 * max(1, 4 // itemsize)          # sublane multiple for the dtype
    m_cap = _round_up(M, sub)

    def footprint(tm, th):
        return (2 * tm * C * itemsize        # x blocks (double buffered)
                + 2 * C * th * itemsize      # W_fc blocks
                + 2 * th * C * itemsize      # W_proj blocks
                + 2 * tm * C * itemsize      # out blocks
                + tm * C * 4                 # f32 accumulator scratch
                + tm * th * 4                # f32 GELU intermediate
                + 2 * (th + C) * 4)          # biases (f32)

    # Prefer th = H (weights DMA'd exactly once for the whole kernel), then
    # progressively smaller hidden tiles; for each th take the largest row
    # tile that fits the VMEM budget.
    th_candidates = [H] + [t for t in (4096, 2048, 1024, 512, 256, 128) if t < H]
    tm_candidates = (1024, 512, 256, 128, 64, 32, 16, 8)

    chosen = None
    for th in th_candidates:
        for tm in tm_candidates:
            tm_eff = _round_up(min(tm, m_cap), sub)
            if footprint(tm_eff, th) <= budget:
                chosen = (tm_eff, th)
                break
        if chosen is not None:
            break
    if chosen is None:
        chosen = (sub, H if H < 128 else 128)
    tm, th = chosen

    # v7x has 2 TensorCores: make sure the "parallel" row axis has >= 2 tiles
    # whenever there is enough work to split.
    if _cdiv(_round_up(M, sub), tm) == 1 and M >= 2 * sub:
        tm = _round_up(_cdiv(M, 2), sub)

    return tm, th


def mlp_forward(x, w_fc, b_fc, w_proj, b_proj, *, dropout_p=0.0, seed=0,
                compute_dtype=None):
    """x: (..., C).  w_fc: (C, 4C), b_fc: (4C,), w_proj: (4C, C), b_proj: (C,).

    Weights are in "x @ W" (JAX) layout, i.e. the transpose of torch Linear's
    (out, in) storage.  b_fc / b_proj may be None (config.bias=False).
    compute_dtype=jnp.bfloat16 runs both matmuls on the bf16 MXU path.
    """
    assert 0.0 <= float(dropout_p) < 1.0
    orig_shape = x.shape
    C = orig_shape[-1]
    H = w_fc.shape[1]
    M = math.prod(orig_shape[:-1]) if len(orig_shape) > 1 else 1
    out_dtype = x.dtype

    cdt = jnp.dtype(compute_dtype) if compute_dtype is not None else jnp.dtype(x.dtype)
    x2 = x.reshape(M, C).astype(cdt)
    w_fc = w_fc.astype(cdt)
    w_proj = w_proj.astype(cdt)

    if b_fc is None:
        b_fc = jnp.zeros((H,), jnp.float32)
    if b_proj is None:
        b_proj = jnp.zeros((C,), jnp.float32)
    b1r = b_fc.reshape(1, H).astype(jnp.float32)
    b2r = b_proj.reshape(1, C).astype(jnp.float32)

    # --- generation-aware tile / VMEM budgets ---
    cap = _vmem_capacity_bytes()
    budget = int(cap * 0.60)            # tile working set
    vmem_limit = int(cap * 0.85)        # scoped VMEM limit (leave headroom)
    tm, th = _choose_tiles(M, C, H, cdt.itemsize, budget)

    # --- row tiling (parallel axis) ---
    Mp = _round_up(M, tm)
    if Mp != M:
        x2 = jnp.pad(x2, ((0, Mp - M), (0, 0)))

    # --- hidden tiling (reduction axis); padded hidden units contribute 0 ---
    if th >= H:
        th, Hp = H, H
    else:
        Hp = _round_up(H, th)
    if Hp != H:
        w_fc = jnp.pad(w_fc, ((0, 0), (0, Hp - H)))
        b1r = jnp.pad(b1r, ((0, 0), (0, Hp - H)))
        w_proj = jnp.pad(w_proj, ((0, Hp - H), (0, 0)))

    grid = (Mp // tm, Hp // th)
    kernel = partial(_mlp_kernel, dropout_p=float(dropout_p), seed=int(seed))

    cost = pl.CostEstimate(
        flops=4 * Mp * C * Hp,
        transcendentals=Mp * Hp,
        bytes_accessed=(Mp * C + C * Hp + Hp * C + Mp * C) * cdt.itemsize)

    out = pl.pallas_call(
        kernel,
        out_shape=jax.ShapeDtypeStruct((Mp, C), out_dtype),
        grid_spec=pltpu.PrefetchScalarGridSpec(
            num_scalar_prefetch=0,
            grid=grid,
            in_specs=[
                pl.BlockSpec((tm, C), lambda i, j: (i, 0)),   # x rows
                pl.BlockSpec((C, th), lambda i, j: (0, j)),   # W_fc cols
                pl.BlockSpec((1, th), lambda i, j: (0, j)),   # b_fc slice
                pl.BlockSpec((th, C), lambda i, j: (j, 0)),   # W_proj rows
                pl.BlockSpec((1, C), lambda i, j: (0, 0)),    # b_proj
            ],
            out_specs=pl.BlockSpec((tm, C), lambda i, j: (i, 0)),
            scratch_shapes=[pltpu.VMEM((tm, C), jnp.float32)],
        ),
        compiler_params=pltpu.CompilerParams(
            dimension_semantics=("parallel", "arbitrary"),
            vmem_limit_bytes=vmem_limit),
        cost_estimate=cost,
    )(x2, w_fc, b1r, w_proj, b2r)

    return out[:M].reshape(orig_shape)


def _reference(x, w_fc, b_fc, w_proj, b_proj):
    """Pure-JAX port of MLP.forward (dropout in eval mode)."""
    hp = jax.lax.Precision.HIGHEST
    h = jnp.dot(x, w_fc, precision=hp) + b_fc
    h = _new_gelu(h)
    return jnp.dot(h, w_proj, precision=hp) + b_proj


if __name__ == "__main__":
    batch, seq, n_embd = 2, 8, 32
    hidden = 4 * n_embd

    key = jax.random.PRNGKey(0)
    kx, k1, kb1, k2, kb2 = jax.random.split(key, 5)
    x = jax.random.normal(kx, (batch, seq, n_embd), dtype=jnp.float32)
    # N(0,1) init per _reset_parameters, scaled to keep activations O(1).
    w_fc = jax.random.normal(k1, (n_embd, hidden), dtype=jnp.float32) * 0.1
    b_fc = jax.random.normal(kb1, (hidden,), dtype=jnp.float32) * 0.1
    w_proj = jax.random.normal(k2, (hidden, n_embd), dtype=jnp.float32) * 0.1
    b_proj = jax.random.normal(kb2, (n_embd,), dtype=jnp.float32) * 0.1

    out = mlp_forward(x, w_fc, b_fc, w_proj, b_proj, dropout_p=0.0)
    out = jax.block_until_ready(out)

    ref = _reference(x, w_fc, b_fc, w_proj, b_proj)

    assert out.shape == (batch, seq, n_embd), out.shape
    assert out.dtype == jnp.float32
    assert jnp.allclose(out, ref, atol=2e-3, rtol=2e-3), (
        float(jnp.max(jnp.abs(out - ref))))

    print("KERNEL_OK")
</pallas_src>

<mosaic_0001>
module attributes {stable_mosaic.version = 11 : i64} {
  func.func @_mlp_kernel(%arg0: i32, %arg1: i32, %arg2: memref<8x32xf32, #tpu.memory_space<vmem>>, %arg3: memref<32x128xf32, #tpu.memory_space<vmem>>, %arg4: memref<1x128xf32, #tpu.memory_space<vmem>>, %arg5: memref<128x32xf32, #tpu.memory_space<vmem>>, %arg6: memref<1x32xf32, #tpu.memory_space<vmem>>, %arg7: memref<8x32xf32, #tpu.memory_space<vmem>>, %arg8: memref<8x32xf32, #tpu.memory_space<vmem>>) attributes {dimension_semantics = [#tpu.dimension_semantics<parallel>, #tpu.dimension_semantics<arbitrary>], iteration_bounds = array<i64: 2, 1>, scalar_prefetch = 0 : i64, scratch_operands = 1 : i64, tpu.core_type = #tpu.core_type<tc>, window_params = [{transform_indices = @transform_0, window_bounds = array<i64: 8, 32>}, {transform_indices = @transform_1, window_bounds = array<i64: 32, 128>}, {transform_indices = @transform_2, window_bounds = array<i64: 1, 128>}, {transform_indices = @transform_3, window_bounds = array<i64: 128, 32>}, {pipeline_mode = #tpu.pipeline_mode<synchronous>, transform_indices = @transform_4, window_bounds = array<i64: 1, 32>}, {transform_indices = @transform_5, window_bounds = array<i64: 8, 32>}]} {
    %c0_i32 = arith.constant 0 : i32
    %0 = arith.cmpi eq, %arg1, %c0_i32 : i32
    %1 = arith.extui %0 : i1 to i32
    %c0_i32_0 = arith.constant 0 : i32
    %2 = arith.cmpi ne, %1, %c0_i32_0 : i32
    scf.if %2 {
      %c0_19 = arith.constant 0 : index
      %c0_20 = arith.constant 0 : index
      %30 = vector.load %arg6[%c0_19, %c0_20] : memref<1x32xf32, #tpu.memory_space<vmem>>, vector<1x32xf32>
      %31 = vector.shape_cast %30 : vector<1x32xf32> to vector<1x32xf32>
      %32 = vector.broadcast %31 : vector<1x32xf32> to vector<8x32xf32>
      %c0_21 = arith.constant 0 : index
      %c0_22 = arith.constant 0 : index
      %33 = vector.load %arg8[%c0_21, %c0_22] : memref<8x32xf32, #tpu.memory_space<vmem>>, vector<8x32xf32>
      tpu.vector_store %arg8[%c0_21, %c0_22], %32 {strides = array<i32>} : memref<8x32xf32, #tpu.memory_space<vmem>>, vector<8x32xf32>,
    } else {
    }
    %c0 = arith.constant 0 : index
    %c0_1 = arith.constant 0 : index
    %3 = vector.load %arg2[%c0, %c0_1] : memref<8x32xf32, #tpu.memory_space<vmem>>, vector<8x32xf32>
    %c0_2 = arith.constant 0 : index
    %c0_3 = arith.constant 0 : index
    %4 = vector.load %arg3[%c0_2, %c0_3] : memref<32x128xf32, #tpu.memory_space<vmem>>, vector<32x128xf32>
    %cst = arith.constant dense<0.000000e+00> : vector<8x128xf32>
    %5 = tpu.matmul %3, %4, %cst {dimension_numbers = #tpu.dot_dimension_numbers<[1], [0], [0], [1], [0, 0, 1, 1], [], []>} : vector<8x32xf32>, vector<32x128xf32>, vector<8x128xf32> -> vector<8x128xf32>
    %c0_4 = arith.constant 0 : index
    %c0_5 = arith.constant 0 : index
    %6 = vector.load %arg4[%c0_4, %c0_5] : memref<1x128xf32, #tpu.memory_space<vmem>>, vector<1x128xf32>
    %7 = vector.broadcast %6 : vector<1x128xf32> to vector<8x128xf32>
    %8 = arith.addf %5, %7 : vector<8x128xf32>
    %cst_6 = arith.constant 5.000000e-01 : f32
    %9 = vector.broadcast %cst_6 : f32 to vector<8x128xf32>
    %10 = arith.mulf %9, %8 : vector<8x128xf32>
    %11 = arith.mulf %8, %8 : vector<8x128xf32>
    %12 = arith.mulf %11, %8 : vector<8x128xf32>
    %cst_7 = arith.constant 4.471500e-02 : f32
    %13 = vector.broadcast %cst_7 : f32 to vector<8x128xf32>
    %14 = arith.mulf %13, %12 : vector<8x128xf32>
    %15 = arith.addf %8, %14 : vector<8x128xf32>
    %cst_8 = arith.constant 0.797884583 : f32
    %16 = vector.broadcast %cst_8 : f32 to vector<8x128xf32>
    %17 = arith.mulf %16, %15 : vector<8x128xf32>
    %18 = math.tanh %17 : vector<8x128xf32>
    %cst_9 = arith.constant 1.000000e+00 : f32
    %19 = vector.broadcast %cst_9 : f32 to vector<8x128xf32>
    %20 = arith.addf %19, %18 : vector<8x128xf32>
    %21 = arith.mulf %10, %20 : vector<8x128xf32>
    %c0_10 = arith.constant 0 : index
    %c0_11 = arith.constant 0 : index
    %22 = vector.load %arg8[%c0_10, %c0_11] : memref<8x32xf32, #tpu.memory_space<vmem>>, vector<8x32xf32>
    %c0_12 = arith.constant 0 : index
    %c0_13 = arith.constant 0 : index
    %23 = vector.load %arg5[%c0_12, %c0_13] : memref<128x32xf32, #tpu.memory_space<vmem>>, vector<128x32xf32>
    %cst_14 = arith.constant dense<0.000000e+00> : vector<8x32xf32>
    %24 = tpu.matmul %21, %23, %cst_14 {dimension_numbers = #tpu.dot_dimension_numbers<[1], [0], [0], [1], [0, 0, 1, 1], [], []>} : vector<8x128xf32>, vector<128x32xf32>, vector<8x32xf32> -> vector<8x32xf32>
    %25 = arith.addf %22, %24 : vector<8x32xf32>
    %c0_15 = arith.constant 0 : index
    %c0_16 = arith.constant 0 : index
    %26 = vector.load %arg8[%c0_15, %c0_16] : memref<8x32xf32, #tpu.memory_space<vmem>>, vector<8x32xf32>
    tpu.vector_store %arg8[%c0_15, %c0_16], %25 {strides = array<i32>} : memref<8x32xf32, #tpu.memory_space<vmem>>, vector<8x32xf32>,
    %c0_i32_17 = arith.constant 0 : i32
    %27 = arith.cmpi eq, %arg1, %c0_i32_17 : i32
    %28 = arith.extui %27 : i1 to i32
    %c0_i32_18 = arith.constant 0 : i32
    %29 = arith.cmpi ne, %28, %c0_i32_18 : i32
    scf.if %29 {
      %c0_19 = arith.constant 0 : index
      %c0_20 = arith.constant 0 : index
      %30 = vector.load %arg8[%c0_19, %c0_20] : memref<8x32xf32, #tpu.memory_space<vmem>>, vector<8x32xf32>
      %c0_21 = arith.constant 0 : index
      %c0_22 = arith.constant 0 : index
      %31 = vector.load %arg7[%c0_21, %c0_22] : memref<8x32xf32, #tpu.memory_space<vmem>>, vector<8x32xf32>
      tpu.vector_store %arg7[%c0_21, %c0_22], %30 {strides = array<i32>} : memref<8x32xf32, #tpu.memory_space<vmem>>, vector<8x32xf32>,
    } else {
    }
    return
  }
  func.func @transform_0(%arg0: i32, %arg1: i32) -> (i32, i32) {
    %c0_i32 = arith.constant 0 : i32
    %c0_i32_0 = arith.constant 0 : i32
    return %arg0, %c0_i32 : i32, i32
  }
  func.func @transform_1(%arg0: i32, %arg1: i32) -> (i32, i32) {
    %c0_i32 = arith.constant 0 : i32
    %c0_i32_0 = arith.constant 0 : i32
    return %c0_i32, %arg1 : i32, i32
  }
  func.func @transform_2(%arg0: i32, %arg1: i32) -> (i32, i32) {
    %c0_i32 = arith.constant 0 : i32
    %c0_i32_0 = arith.constant 0 : i32
    return %c0_i32, %arg1 : i32, i32
  }
  func.func @transform_3(%arg0: i32, %arg1: i32) -> (i32, i32) {
    %c0_i32 = arith.constant 0 : i32
    %c0_i32_0 = arith.constant 0 : i32
    return %arg1, %c0_i32 : i32, i32
  }
  func.func @transform_4(%arg0: i32, %arg1: i32) -> (i32, i32) {
    %c0_i32 = arith.constant 0 : i32
    %c0_i32_0 = arith.constant 0 : i32
    %c0_i32_1 = arith.constant 0 : i32
    return %c0_i32, %c0_i32_0 : i32, i32
  }
  func.func @transform_5(%arg0: i32, %arg1: i32) -> (i32, i32) {
    %c0_i32 = arith.constant 0 : i32
    %c0_i32_0 = arith.constant 0 : i32
    return %arg0, %c0_i32 : i32, i32
  }
}

</mosaic_0001>

<llo_original>
// kernel: tpu_custom_call.1
$region0: #{tpu_custom_call.1}
  #allocation0 [shape = 'u32[]', space=smem, size = 0x4, offset = 0x4, fixed_abs, tag = 'smem constant byte address 0x4 - core index']
  #allocation1 [shape = 'u32[144,128]{1,0:T(1,128)}', space=vmem, size = 0x12000, scoped, tag = 'internal scratch']
  #allocation2 [shape = 'f32[8,32]{1,0:T(8,128)}', space=vmem, size = 0x1000, scoped, tag = 'scratch operand']
  %s0 = inlined_call_operand.vmem [shape: f32[16,32], index: 0, kind: input, shape index: {}]
  %s1 = inlined_call_operand.vmem [shape: f32[32,128], index: 1, kind: input, shape index: {}]
  %s2 = inlined_call_operand.vmem [shape: f32[1,128], index: 2, kind: input, shape index: {}]
  %s3 = inlined_call_operand.vmem [shape: f32[128,32], index: 3, kind: input, shape index: {}]
  %s4 = inlined_call_operand.vmem [shape: f32[1,32], index: 4, kind: input, shape index: {}]
  %s5 = inlined_call_operand.hbm [shape: f32[16,32], index: 5, kind: output, shape index: {}]
  %s6 = sld [smem:[#allocation0]]
  $region61: #{tpu_custom_call.1} parent=0
    _
  %s8 = ssub.s32 1, %s6
  %s9 = scalar_select 0, %s8, %s6
  $region1: #{tpu_custom_call.1} parent=0
    #allocation3 [shape = 'u8[8192]{0}', space=vmem, size = 0x2000, scoped, tag = 'output window, operand 0']
    #allocation4 [shape = 's32[2]{0}', space=sflag, size = 0x8, scoped, tag = 'scoped memory for tpu_custom_call.1']
    %10 = vsyncpa [#allocation4], 0
    %s11 = scalar_lea.sflag [#allocation4], 1
    %12 = vsyncpa %s11, 0
    loop: start=0, step=1, limit=4
    $region2: #{tpu_custom_call.1} parent=1 // loop_pre_header
      _
    $region3: #{tpu_custom_call.1} parent=1 // loop_header
      %s14 = sphi 0, %s18
      %p15 = scmp.ge.s32.totalorder %s14, 4
      %s21 = sphi 0, %s33
      %s22 = sphi 0, %s29
      %s23 = sphi 0, %s21
      %s24 = sphi 0, %s22
      %s25 = sphi 0, %s23
      %s26 = sphi 0, %s24
      %s36 = sphi 0, %s38
      %s39 = sphi 0, %s36
      %s40 = sphi 0, %s39
      %s56 = sphi 0, %s40
      %s62 = sphi 0, %s64
      %s65 = sphi 0, %s62
      %s66 = sphi 0, %s65
      %s82 = sphi 0, %s66
      %s88 = sphi 0, %s90
      %s91 = sphi 0, %s88
      %s92 = sphi 0, %s91
      %s108 = sphi 0, %s92
      %s114 = sphi 0, %s116
      %s117 = sphi 0, %s114
      %s118 = sphi 0, %s117
      %s134 = sphi 0, %s118
      %s138 = sphi 0, %s138
      %s140 = sphi 0, %s138
      %s141 = sphi 0, %s140
      %s155 = sphi 0, %s141
      %s161 = sphi 0, %s163
      %s164 = sphi 0, %s161
      %s165 = sphi 0, %s164
      %s181 = sphi 0, %s165
    $region4: #{tpu_custom_call.1} parent=1 // loop_header_branch
      %17 = sbr.rel (%p15) target = $region8
    $region5: #{tpu_custom_call.1} parent=1 // loop_body
      %s19 = ssub.s32 %s14, 1
      %s20 = ssub.s32 %s14, 2
      %s27 = sadd.s32 1, %s22
      %p28 = scmp.ge.s32.totalorder %s27, 1
      %s29 = scalar_select %p28, 0, %s27
      %s30 = sadd.s32 1, %s21
      %s31 = scalar_select %p28, %s30, %s21
      %p32 = scmp.ge.s32.totalorder %s31, 2
      %s33 = scalar_select %p32, 0, %s31
      %s34 = ssub.s32 %s21, %s33
      %p35 = scmp.eq.s32.totalorder %s34, 0
      %s37 = sadd.s32 %s36, 1
      %s38 = scalar_select %p35, %s36, %s37
      %p41 = pneg %p35
      %p42 = scmp.eq.s32.totalorder %s14, 1
      %p43 = por %p41, %p42
      %p44 = scmp.ne.s32.totalorder %s36, %s39
      %p45 = scmp.eq.s32.totalorder %s14, 0
      %p46 = por %p44, %p45
      %p47 = scmp.ne.s32.totalorder %s36, %s39
      %p48 = scmp.eq.s32.totalorder %s19, 1
      %p49 = por %p47, %p48
      %p50 = scmp.ne.s32.totalorder %s39, %s40
      %p51 = scmp.eq.s32.totalorder %s19, 0
      %p52 = por %p50, %p51
      %p53 = scmp.ne.s32.totalorder %s39, %s40
      %p54 = scmp.eq.s32.totalorder %s20, 1
      %p55 = por %p53, %p54
      %p57 = scmp.ne.s32.totalorder %s40, %s56
      %p58 = scmp.eq.s32.totalorder %s20, 0
      %p59 = por %p57, %p58
      %s60 = ssub.s32 %s22, %s29
      %p61 = scmp.eq.s32.totalorder %s60, 0
      %s63 = sadd.s32 %s62, 1
      %s64 = scalar_select %p61, %s62, %s63
      %p67 = pneg %p61
      %p68 = scmp.eq.s32.totalorder %s14, 1
      %p69 = por %p67, %p68
      %p70 = scmp.ne.s32.totalorder %s62, %s65
      %p71 = scmp.eq.s32.totalorder %s14, 0
      %p72 = por %p70, %p71
      %p73 = scmp.ne.s32.totalorder %s62, %s65
      %p74 = scmp.eq.s32.totalorder %s19, 1
      %p75 = por %p73, %p74
      %p76 = scmp.ne.s32.totalorder %s65, %s66
      %p77 = scmp.eq.s32.totalorder %s19, 0
      %p78 = por %p76, %p77
      %p79 = scmp.ne.s32.totalorder %s65, %s66
      %p80 = scmp.eq.s32.totalorder %s20, 1
      %p81 = por %p79, %p80
      %p83 = scmp.ne.s32.totalorder %s66, %s82
      %p84 = scmp.eq.s32.totalorder %s20, 0
      %p85 = por %p83, %p84
      %s86 = ssub.s32 %s22, %s29
      %p87 = scmp.eq.s32.totalorder %s86, 0
      %s89 = sadd.s32 %s88, 1
      %s90 = scalar_select %p87, %s88, %s89
      %p93 = pneg %p87
      %p94 = scmp.eq.s32.totalorder %s14, 1
      %p95 = por %p93, %p94
      %p96 = scmp.ne.s32.totalorder %s88, %s91
      %p97 = scmp.eq.s32.totalorder %s14, 0
      %p98 = por %p96, %p97
      %p99 = scmp.ne.s32.totalorder %s88, %s91
      %p100 = scmp.eq.s32.totalorder %s19, 1
      %p101 = por %p99, %p100
      %p102 = scmp.ne.s32.totalorder %s91, %s92
      %p103 = scmp.eq.s32.totalorder %s19, 0
      %p104 = por %p102, %p103
      %p105 = scmp.ne.s32.totalorder %s91, %s92
      %p106 = scmp.eq.s32.totalorder %s20, 1
      %p107 = por %p105, %p106
      %p109 = scmp.ne.s32.totalorder %s92, %s108
      %p110 = scmp.eq.s32.totalorder %s20, 0
      %p111 = por %p109, %p110
      %s112 = ssub.s32 %s22, %s29
      %p113 = scmp.eq.s32.totalorder %s112, 0
      %s115 = sadd.s32 %s114, 1
      %s116 = scalar_select %p113, %s114, %s115
      %p119 = pneg %p113
      %p120 = scmp.eq.s32.totalorder %s14, 1
      %p121 = por %p119, %p120
      %p122 = scmp.ne.s32.totalorder %s114, %s117
      %p123 = scmp.eq.s32.totalorder %s14, 0
      %p124 = por %p122, %p123
      %p125 = scmp.ne.s32.totalorder %s114, %s117
      %p126 = scmp.eq.s32.totalorder %s19, 1
      %p127 = por %p125, %p126
      %p128 = scmp.ne.s32.totalorder %s117, %s118
      %p129 = scmp.eq.s32.totalorder %s19, 0
      %p130 = por %p128, %p129
      %p131 = scmp.ne.s32.totalorder %s117, %s118
      %p132 = scmp.eq.s32.totalorder %s20, 1
      %p133 = por %p131, %p132
      %p135 = scmp.ne.s32.totalorder %s118, %s134
      %p136 = scmp.eq.s32.totalorder %s20, 0
      %p137 = por %p135, %p136
      %s139 = sadd.s32 %s138, 1
      %p142 = scmp.eq.s32.totalorder %s14, 1
      %p143 = scmp.ne.s32.totalorder %s138, %s140
      %p144 = scmp.eq.s32.totalorder %s14, 0
      %p145 = por %p143, %p144
      %p146 = scmp.ne.s32.totalorder %s138, %s140
      %p147 = scmp.eq.s32.totalorder %s19, 1
      %p148 = por %p146, %p147
      %p149 = scmp.ne.s32.totalorder %s140, %s141
      %p150 = scmp.eq.s32.totalorder %s19, 0
      %p151 = por %p149, %p150
      %p152 = scmp.ne.s32.totalorder %s140, %s141
      %p153 = scmp.eq.s32.totalorder %s20, 1
      %p154 = por %p152, %p153
      %p156 = scmp.ne.s32.totalorder %s141, %s155
      %p157 = scmp.eq.s32.totalorder %s20, 0
      %p158 = por %p156, %p157
      %s159 = ssub.s32 %s21, %s33
      %p160 = scmp.eq.s32.totalorder %s159, 0
      %s162 = sadd.s32 %s161, 1
      %s163 = scalar_select %p160, %s161, %s162
      %p166 = pneg %p160
      %p167 = scmp.eq.s32.totalorder %s14, 1
      %p168 = por %p166, %p167
      %p169 = scmp.ne.s32.totalorder %s161, %s164
      %p170 = scmp.eq.s32.totalorder %s14, 0
      %p171 = por %p169, %p170
      %p172 = scmp.ne.s32.totalorder %s161, %s164
      %p173 = scmp.eq.s32.totalorder %s19, 1
      %p174 = por %p172, %p173
      %p175 = scmp.ne.s32.totalorder %s164, %s165
      %p176 = scmp.eq.s32.totalorder %s19, 0
      %p177 = por %p175, %p176
      %p178 = scmp.ne.s32.totalorder %s164, %s165
      %p179 = scmp.eq.s32.totalorder %s20, 1
      %p180 = por %p178, %p179
      %p182 = scmp.ne.s32.totalorder %s165, %s181
      %p183 = scmp.eq.s32.totalorder %s20, 0
      %p184 = por %p182, %p183
      %p185 = scmp.le.s32.totalorder 1, %s14
      %p186 = scmp.lt.s32.totalorder %s14, 3
      %p187 = pnand %p185, %p186
      %p188 = pneg %p187
      // Predicated region
      $region9: #{tpu_custom_call.1} parent=5 // pred_check
        _
      $region10: #{tpu_custom_call.1} parent=5 // pred_check_branch
        %190 = sbr.rel (%p187) target = $region12
      $region11: #{tpu_custom_call.1} parent=5 // pred_region
        %s191 = ssub.s32 %s14, 1
        // Predicated region
        $region13: #{tpu_custom_call.1} parent=11 // pred_check
          %p192 = pneg %p78
        $region14: #{tpu_custom_call.1} parent=11 // pred_check_branch
          %194 = sbr.rel (%p192) target = $region16
        $region15: #{tpu_custom_call.1} parent=11 // pred_region
          %p195 = scmp.lt.s32.totalorder %s24, 0
          %s196 = scalar_select %p195, %s24, 0
          %s197 = smul.addr %s196, 8
          %s198 = scalar_lea.vmem %s1, %s197
        $region16: #{tpu_custom_call.1} parent=11 // pred_fallthru
          _
        // Predicated region
        $region17: #{tpu_custom_call.1} parent=11 // pred_check
          %p199 = pneg %p104
        $region18: #{tpu_custom_call.1} parent=11 // pred_check_branch
          %201 = sbr.rel (%p199) target = $region20
        $region19: #{tpu_custom_call.1} parent=11 // pred_region
          %p202 = scmp.lt.s32.totalorder %s24, 0
          %s203 = scalar_select %p202, %s24, 0
          %s204 = scalar_lea.vmem %s2, %s203
        $region20: #{tpu_custom_call.1} parent=11 // pred_fallthru
          _
        // Predicated region
        $region21: #{tpu_custom_call.1} parent=11 // pred_check
          %p205 = pneg %p130
        $region22: #{tpu_custom_call.1} parent=11 // pred_check_branch
          %207 = sbr.rel (%p205) target = $region24
        $region23: #{tpu_custom_call.1} parent=11 // pred_region
          %s208 = smul.u32 16, %s24
          %p209 = scmp.lt.s32.totalorder %s208, 15
          %s210 = scalar_select %p209, %s208, 15
          %s211 = smul.addr %s210, 8
          %s212 = scalar_lea.vmem %s3, %s211
          %s213 = smul.u32 16, %s24
        $region24: #{tpu_custom_call.1} parent=11 // pred_fallthru
          _
        // Predicated region
        $region25: #{tpu_custom_call.1} parent=11 // pred_check
          %p214 = pneg %p151
        $region26: #{tpu_custom_call.1} parent=11 // pred_check_branch
          %216 = sbr.rel (%p214) target = $region28
        $region27: #{tpu_custom_call.1} parent=11 // pred_region
          _
        $region28: #{tpu_custom_call.1} parent=11 // pred_fallthru
          _
      $region12: #{tpu_custom_call.1} parent=5 // pred_fallthru
        _
      %p217 = scmp.lt.s32.totalorder %s14, 2
      // Predicated region
      $region29: #{tpu_custom_call.1} parent=5 // pred_check
        %p218 = pneg %p217
      $region30: #{tpu_custom_call.1} parent=5 // pred_check_branch
        %220 = sbr.rel (%p218) target = $region32
      $region31: #{tpu_custom_call.1} parent=5 // pred_region
        // Predicated region
        $region33: #{tpu_custom_call.1} parent=31 // pred_check
          %p221 = pneg %p46
        $region34: #{tpu_custom_call.1} parent=31 // pred_check_branch
          %223 = sbr.rel (%p221) target = $region36
        $region35: #{tpu_custom_call.1} parent=31 // pred_region
          %p224 = scmp.lt.s32.totalorder %s21, 1
          %s225 = scalar_select %p224, %s21, 1
          %s226 = smul.addr %s225, 8
          %s227 = scalar_lea.vmem %s0, %s226
        $region36: #{tpu_custom_call.1} parent=31 // pred_fallthru
          _
      $region32: #{tpu_custom_call.1} parent=5 // pred_fallthru
        _
      %p228 = scmp.le.s32.totalorder 1, %s14
      %p229 = scmp.lt.s32.totalorder %s14, 3
      %p230 = pnand %p228, %p229
      %p231 = pneg %p230
      // Predicated region
      $region37: #{tpu_custom_call.1} parent=5 // pred_check
        _
      $region38: #{tpu_custom_call.1} parent=5 // pred_check_branch
        %233 = sbr.rel (%p230) target = $region40
      $region39: #{tpu_custom_call.1} parent=5 // pred_region
        %s234 = ssub.s32 %s14, 1
        %p235 = scmp.lt.s32.totalorder %s23, 1
        %s236 = scalar_select %p235, %s23, 1
        %s237 = smul.addr %s236, 8
        %s238 = scalar_lea.vmem %s0, %s237
        %p239 = pneg %p52
        %p240 = pneg %p49
        %p241 = scmp.lt.s32.totalorder %s24, 0
        %s242 = scalar_select %p241, %s24, 0
        %s243 = smul.addr %s242, 8
        %s244 = scalar_lea.vmem %s1, %s243
        %p245 = pneg %p78
        %p246 = pneg %p75
        %p247 = scmp.lt.s32.totalorder %s24, 0
        %s248 = scalar_select %p247, %s24, 0
        %s249 = scalar_lea.vmem %s2, %s248
        %p250 = pneg %p104
        %p251 = pneg %p101
        %s252 = smul.u32 16, %s24
        %p253 = scmp.lt.s32.totalorder %s252, 15
        %s254 = scalar_select %p253, %s252, 15
        %s255 = smul.addr %s254, 8
        %s256 = scalar_lea.vmem %s3, %s255
        %p257 = pneg %p130
        %p258 = pneg %p127
        %p259 = pneg %p151
        %p260 = pneg %p148
        %p261 = pneg %p177
        %p262 = pneg %p174
        %s263 = sand.u32 %s164, 1
        %s264 = scalar_lea.sflag [#allocation4], %s263
        %s265 = sand.u32 %s164, 1
        %s266 = smul.addr %s265, 8
        %s267 = scalar_lea.vmem [#allocation3], %s266
        %p268 = scmp.lt.s32.totalorder %s23, 1
        %s269 = scalar_select %p268, %s23, 1
        %s270 = smul.addr %s269, 8
        %s271 = scalar_lea.vmem %s0, %s270
        %p272 = scmp.lt.s32.totalorder %s24, 0
        %s273 = scalar_select %p272, %s24, 0
        %s274 = smul.addr %s273, 8
        %s275 = scalar_lea.vmem %s1, %s274
        %p276 = scmp.lt.s32.totalorder %s24, 0
        %s277 = scalar_select %p276, %s24, 0
        %s278 = scalar_lea.vmem %s2, %s277
        %s279 = smul.u32 16, %s24
        %p280 = scmp.lt.s32.totalorder %s279, 15
        %s281 = scalar_select %p280, %s279, 15
        %s282 = smul.addr %s281, 8
        %s283 = scalar_lea.vmem %s3, %s282
        %s284 = smul.u32 16, %s24
        %p285 = scmp.eq.s32.totalorder %s24, 0
        // Predicated region
        $region41: #{tpu_custom_call.1} parent=39 // pred_check
          %p286 = pneg %p285
        $region42: #{tpu_custom_call.1} parent=39 // pred_check_branch
          %288 = sbr.rel (%p286) target = $region44
        $region43: #{tpu_custom_call.1} parent=39 // pred_region
          %v289 = vld [vmem:[%s4] sm:$0x1]
          %v291 = vlaneseq
          %v292 = vshrl.u32 %v291, 7
          %v293 = vsub.s32 0, %v292
          %v294 = vrot.slane %v289, %v293
          %vm296 = vcmask 261120
          %297 = vst.msk [vmem:[#allocation2] sm:$0xff] %vm296, %v294
        $region44: #{tpu_custom_call.1} parent=39 // pred_fallthru
          _
        %v298 = vld [vmem:[%s271] sm:$0xff]
        %v299 = vld [vmem:[%s275] sm:$0xff]
        %v300 = vld [vmem:[%s275 + $0x8] sm:$0xff]
        %v301 = vld [vmem:[%s275 + $0x10] sm:$0xff]
        %v302 = vld [vmem:[%s275 + $0x18] sm:$0xff]
        %v303 = vld [vmem:[%s278] sm:$0x1]
        %v305 = vlaneseq
        %v306 = vshrl.u32 %v305, 7
        %v307 = vsub.s32 0, %v306
        %v308 = vrot.slane %v303, %v307
        %vm310 = vcmask 261120
        %v312 = vsel %vm310, %v298, 0
        %314 = vmatprep.subr.mxu0 0.0
        %315 = vmatpush1.msra.mxu0 %v299
        %316 = vmatprep.subr.mxu0 0.0
        %317 = vmatpush1.msra.mxu0 %v300
        %318 = vmatprep.subr.mxu0 0.0
        %319 = vmatpush1.msra.mxu0 %v301
        %320 = vmatprep.subr.mxu0 0.0
        %321 = vmatpush1.msra.mxu0 %v302
        %322 = vmatprep.subr.mxu0 0.0
        %323 = vmatpush1.msra.mxu0 0.0
        %324 = vmatprep.subr.mxu0 0.0
        %325 = vmatpush1.msra.mxu0 0.0
        %326 = vmatprep.subr.mxu0 0.0
        %327 = vmatpush1.msra.mxu0 0.0
        %328 = vmatprep.subr.mxu0 0.0
        %329 = vmatpush1.msra.mxu0 0.0
        %330 = vmatprep.subr.mxu0 0.0
        %331 = vmatpush1.msra.mxu0 0.0
        %332 = vmatprep.subr.mxu0 0.0
        %333 = vmatpush1.msra.mxu0 0.0
        %334 = vmatprep.subr.mxu0 0.0
        %335 = vmatpush1.msra.mxu0 0.0
        %336 = vmatprep.subr.mxu0 0.0
        %337 = vmatpush1.msra.mxu0 0.0
        %338 = vmatprep.subr.mxu0 0.0
        %339 = vmatpush1.msra.mxu0 0.0
        %340 = vmatprep.subr.mxu0 0.0
        %341 = vmatpush1.msra.mxu0 0.0
        %342 = vmatprep.subr.mxu0 0.0
        %343 = vmatpush1.msra.mxu0 0.0
        %344 = vmatprep.subr.mxu0 0.0
        %345 = vmatpush1.msra.mxu0 0.0
        %346 = vmatprep.subr.mxu0 0.0
        %347 = vmatpush1.msra.mxu0 0.0
        %348 = vmatprep.subr.mxu0 0.0
        %349 = vmatpush1.msra.mxu0 0.0
        %350 = vmatprep.subr.mxu0 0.0
        %351 = vmatpush1.msra.mxu0 0.0
        %352 = vmatprep.subr.mxu0 0.0
        %353 = vmatpush1.msra.mxu0 0.0
        %354 = vmatprep.subr.mxu0 0.0
        %355 = vmatpush1.msra.mxu0 0.0
        %356 = vmatprep.subr.mxu0 0.0
        %357 = vmatpush1.msra.mxu0 0.0
        %358 = vmatprep.subr.mxu0 0.0
        %359 = vmatpush1.msra.mxu0 0.0
        %360 = vmatprep.subr.mxu0 0.0
        %361 = vmatpush1.msra.mxu0 0.0
        %362 = vmatprep.subr.mxu0 0.0
        %363 = vmatpush1.msra.mxu0 0.0
        %364 = vmatprep.subr.mxu0 0.0
        %365 = vmatpush1.msra.mxu0 0.0
        %366 = vmatprep.subr.mxu0 0.0
        %367 = vmatpush1.msra.mxu0 0.0
        %368 = vmatprep.subr.mxu0 0.0
        %369 = vmatpush1.msra.mxu0 0.0
        %370 = vmatprep.subr.mxu0 0.0
        %371 = vmatpush1.msra.mxu0 0.0
        %372 = vmatprep.subr.mxu0 0.0
        %373 = vmatpush1.msra.mxu0 0.0
        %374 = vmatprep.subr.mxu0 0.0
        %375 = vmatpush1.msra.mxu0 0.0
        %376 = vmatprep.subr.mxu0 0.0
        %377 = vmatpush1.msra.mxu0 0.0
        %378 = vmatprep.mubr.f32.mxu0 0.0
        %379 = vmatmul.mubr.f32.gmra.mrb[0].mxu0 %v312
        %v380 = vpop.f32.mrb[0].mxu0
        %v381 = vadd.f32 %v308, %v380
        %v382 = vpop.f32.mrb[0].mxu0
        %383 = vdwg.mxu0
        %v384 = vmul.f32 %v381, 0.5
        %v385 = vmul.f32 %v381, %v381
        %v386 = vmul.f32 %v385, %v381
        %v387 = vmul.f32 %v386, 0.044715
        %v388 = vadd.f32 %v381, %v387
        %v389 = vmul.f32 %v388, 0.7978846
        %v390 = vtanh.pop %v389
        %v391 = vadd.f32 %v390, 1.0
        %v392 = vmul.f32 %v384, %v391
        %v393 = vld [vmem:[#allocation2] sm:$0xff]
        %v394 = vld [vmem:[%s283] sm:$0xff]
        %v395 = vld [vmem:[%s283 + $0x8] sm:$0xff]
        %v396 = vld [vmem:[%s283 + $0x10] sm:$0xff]
        %v397 = vld [vmem:[%s283 + $0x18] sm:$0xff]
        %v398 = vld [vmem:[%s283 + $0x20] sm:$0xff]
        %v399 = vld [vmem:[%s283 + $0x28] sm:$0xff]
        %v400 = vld [vmem:[%s283 + $0x30] sm:$0xff]
        %v401 = vld [vmem:[%s283 + $0x38] sm:$0xff]
        %v402 = vld [vmem:[%s283 + $0x40] sm:$0xff]
        %v403 = vld [vmem:[%s283 + $0x48] sm:$0xff]
        %v404 = vld [vmem:[%s283 + $0x50] sm:$0xff]
        %v405 = vld [vmem:[%s283 + $0x58] sm:$0xff]
        %v406 = vld [vmem:[%s283 + $0x60] sm:$0xff]
        %v407 = vld [vmem:[%s283 + $0x68] sm:$0xff]
        %v408 = vld [vmem:[%s283 + $0x70] sm:$0xff]
        %v409 = vld [vmem:[%s283 + $0x78] sm:$0xff]
        %410 = vmatprep.subr.mxu0 0.0
        %411 = vmatpush1.msra.mxu0 %v394
        %412 = vmatprep.subr.mxu0 0.0
        %413 = vmatpush1.msra.mxu0 %v395
        %414 = vmatprep.subr.mxu0 0.0
        %415 = vmatpush1.msra.mxu0 %v396
        %416 = vmatprep.subr.mxu0 0.0
        %417 = vmatpush1.msra.mxu0 %v397
        %418 = vmatprep.subr.mxu0 0.0
        %419 = vmatpush1.msra.mxu0 %v398
        %420 = vmatprep.subr.mxu0 0.0
        %421 = vmatpush1.msra.mxu0 %v399
        %422 = vmatprep.subr.mxu0 0.0
        %423 = vmatpush1.msra.mxu0 %v400
        %424 = vmatprep.subr.mxu0 0.0
        %425 = vmatpush1.msra.mxu0 %v401
        %426 = vmatprep.subr.mxu0 0.0
        %427 = vmatpush1.msra.mxu0 %v402
        %428 = vmatprep.subr.mxu0 0.0
        %429 = vmatpush1.msra.mxu0 %v403
        %430 = vmatprep.subr.mxu0 0.0
        %431 = vmatpush1.msra.mxu0 %v404
        %432 = vmatprep.subr.mxu0 0.0
        %433 = vmatpush1.msra.mxu0 %v405
        %434 = vmatprep.subr.mxu0 0.0
        %435 = vmatpush1.msra.mxu0 %v406
        %436 = vmatprep.subr.mxu0 0.0
        %437 = vmatpush1.msra.mxu0 %v407
        %438 = vmatprep.subr.mxu0 0.0
        %439 = vmatpush1.msra.mxu0 %v408
        %440 = vmatprep.subr.mxu0 0.0
        %441 = vmatpush1.msra.mxu0 %v409
        %442 = vmatprep.subr.mxu0 0.0
        %443 = vmatpush1.msra.mxu0 0.0
        %444 = vmatprep.subr.mxu0 0.0
        %445 = vmatpush1.msra.mxu0 0.0
        %446 = vmatprep.subr.mxu0 0.0
        %447 = vmatpush1.msra.mxu0 0.0
        %448 = vmatprep.subr.mxu0 0.0
        %449 = vmatpush1.msra.mxu0 0.0
        %450 = vmatprep.subr.mxu0 0.0
        %451 = vmatpush1.msra.mxu0 0.0
        %452 = vmatprep.subr.mxu0 0.0
        %453 = vmatpush1.msra.mxu0 0.0
        %454 = vmatprep.subr.mxu0 0.0
        %455 = vmatpush1.msra.mxu0 0.0
        %456 = vmatprep.subr.mxu0 0.0
        %457 = vmatpush1.msra.mxu0 0.0
        %458 = vmatprep.subr.mxu0 0.0
        %459 = vmatpush1.msra.mxu0 0.0
        %460 = vmatprep.subr.mxu0 0.0
        %461 = vmatpush1.msra.mxu0 0.0
        %462 = vmatprep.subr.mxu0 0.0
        %463 = vmatpush1.msra.mxu0 0.0
        %464 = vmatprep.subr.mxu0 0.0
        %465 = vmatpush1.msra.mxu0 0.0
        %466 = vmatprep.subr.mxu0 0.0
        %467 = vmatpush1.msra.mxu0 0.0
        %468 = vmatprep.subr.mxu0 0.0
        %469 = vmatpush1.msra.mxu0 0.0
        %470 = vmatprep.subr.mxu0 0.0
        %471 = vmatpush1.msra.mxu0 0.0
        %472 = vmatprep.subr.mxu0 0.0
        %473 = vmatpush1.msra.mxu0 0.0
        %474 = vmatprep.mubr.f32.mxu0 0.0
        %475 = vmatmul.mubr.f32.gmra.mrb[0].mxu0 %v392
        %v476 = vpop.f32.mrb[0].mxu0
        %v477 = vadd.f32 0.0, %v476
        %v478 = vpop.f32.mrb[0].mxu0
        %479 = vdwg.mxu0
        %v480 = vadd.f32 %v393, %v477
        %481 = vst.msk [vmem:[#allocation2] sm:$0xff] %vm310, %v480
        // Predicated region
        $region45: #{tpu_custom_call.1} parent=39 // pred_check
          %p482 = pneg %p285
        $region46: #{tpu_custom_call.1} parent=39 // pred_check_branch
          %484 = sbr.rel (%p482) target = $region48
        $region47: #{tpu_custom_call.1} parent=39 // pred_region
          %v485 = vld [vmem:[#allocation2] sm:$0xff]
          %486 = vst.msk [vmem:[%s267] sm:$0xff] %vm310, %v485
        $region48: #{tpu_custom_call.1} parent=39 // pred_fallthru
          _
        %s487 = sand.u32 %s164, 1
        %s488 = scalar_lea.sflag [#allocation4], %s487
        %s489 = sand.u32 %s164, 1
        %s490 = smul.addr %s489, 8
        %s491 = scalar_lea.vmem [#allocation3], %s490
        // Predicated region
        $region49: #{tpu_custom_call.1} parent=39 // pred_check
          %p492 = pneg %p174
        $region50: #{tpu_custom_call.1} parent=39 // pred_check_branch
          %494 = sbr.rel (%p492) target = $region52
        $region51: #{tpu_custom_call.1} parent=39 // pred_region
          %s496 = ssub.s32 128, 128
          %497 = vsyncadd %s488, %s496
          %s498 = smul.addr %s23, 128
          %s499 = scalar_lea.hbm %s5, %s498
          %s501 = sshll.u32 %s491, 4
          %s502 = int_to_ptr.vmem [resolvable:$true] %s501
          %504 = dma.vmem_to_hbm [thread:$0]  %s502, 128, %s499, %s488
        $region52: #{tpu_custom_call.1} parent=39 // pred_fallthru
          _
      $region40: #{tpu_custom_call.1} parent=5 // pred_fallthru
        _
      %p505 = scmp.le.s32.totalorder 2, %s14
      // Predicated region
      $region53: #{tpu_custom_call.1} parent=5 // pred_check
        %p506 = pneg %p505
      $region54: #{tpu_custom_call.1} parent=5 // pred_check_branch
        %508 = sbr.rel (%p506) target = $region56
      $region55: #{tpu_custom_call.1} parent=5 // pred_region
        %s509 = ssub.s32 %s14, 2
        // Predicated region
        $region57: #{tpu_custom_call.1} parent=55 // pred_check
          %p510 = pneg %p180
        $region58: #{tpu_custom_call.1} parent=55 // pred_check_branch
          %512 = sbr.rel (%p510) target = $region60
        $region59: #{tpu_custom_call.1} parent=55 // pred_region
          %s513 = sand.u32 %s165, 1
          %s514 = scalar_lea.sflag [#allocation4], %s513
          %s515 = sand.u32 %s165, 1
          %s516 = smul.addr %s515, 8
          %s517 = scalar_lea.vmem [#allocation3], %s516
          %518 = dma.done %s514, 128
        $region60: #{tpu_custom_call.1} parent=55 // pred_fallthru
          _
      $region56: #{tpu_custom_call.1} parent=5 // pred_fallthru
        _
    $region6: #{tpu_custom_call.1} parent=1 // loop_footer
      %s18 = sadd.s32 1, %s14
    $region7: #{tpu_custom_call.1} parent=1 // loop_footer_branch
      %13 = sbr.rel target = $region3
    $region8: #{tpu_custom_call.1} parent=1 // loop_exit
      _
    %519 = vsyncpa [#allocation4], 1
    %s520 = scalar_lea.sflag [#allocation4], 1
    %521 = vsyncpa %s520, 1

</llo_original>
